<compile_context>
chip_gen: v5e
topology: v5e:2x2
jax: 0.10.0
libtpu: 0.0.40
codegen_flags: <defaults>
</compile_context>

<pallas_src>
import jax
import jax.numpy as jnp
from jax.experimental import pallas as pl
from jax.experimental.pallas import tpu as pltpu


def _round_up(x, m):
    return ((x + m - 1) // m) * m


def _patch_embed_kernel(x_ref, w_ref, b_ref, o_ref):
    # x_ref: (tm, Kp) patch tile, w_ref: (Kp, Ep) projection, b_ref: (1, Ep) bias
    acc = jnp.dot(x_ref[...], w_ref[...], preferred_element_type=jnp.float32)
    o_ref[...] = (acc + b_ref[...].astype(jnp.float32)).astype(o_ref.dtype)


def _pick_tm(M, Kp, Ep, compute_bytes, out_bytes):
    """Row tile fitting a ~24 MiB VMEM budget (under the 32 MiB scoped default,
    safe on v7x's 64 MiB physical VMEM as well as v5e/v6e's 128 MiB)."""
    budget = 24 * 1024 * 1024
    fixed = 2 * Kp * Ep * compute_bytes          # weight (worst case 2 buffers)
    per_row = 2 * Kp * compute_bytes + 2 * Ep * out_bytes  # X + out, double-buffered
    tm = (budget - fixed) // max(per_row, 1)
    tm = int(max(8, min(tm, 1024)))              # 1024 rows amortizes ~0.35us/step
    tm = (tm // 8) * 8
    m_cap = _round_up(max(M, 8), 8)
    return max(8, min(tm, m_cap))


def _gemm_call(M, Kp, Ep, tm, out_dtype, compute_bytes, out_bytes,
               *, single_buffer_weights):
    w_kwargs, b_kwargs = {}, {}
    if single_buffer_weights:
        # Constant index_map -> weight/bias never change across the grid; a single
        # VMEM copy is enough, freeing budget for a larger row tile.
        w_kwargs = dict(pipeline_mode=pl.Buffered(1))
        b_kwargs = dict(pipeline_mode=pl.Buffered(1))

    grid = (pl.cdiv(M, tm),)
    cost = pl.CostEstimate(
        flops=2 * M * Kp * Ep,
        transcendentals=0,
        bytes_accessed=(M * Kp + Kp * Ep) * compute_bytes
        + Ep * 4
        + M * Ep * out_bytes,
    )
    return pl.pallas_call(
        _patch_embed_kernel,
        out_shape=jax.ShapeDtypeStruct((M, Ep), out_dtype),
        grid_spec=pltpu.PrefetchScalarGridSpec(
            num_scalar_prefetch=0,
            grid=grid,
            in_specs=[
                pl.BlockSpec((tm, Kp), lambda i: (i, 0)),
                pl.BlockSpec((Kp, Ep), lambda i: (0, 0), **w_kwargs),
                pl.BlockSpec((1, Ep), lambda i: (0, 0), **b_kwargs),
            ],
            out_specs=pl.BlockSpec((tm, Ep), lambda i: (i, 0)),
        ),
        compiler_params=pltpu.CompilerParams(
            # M tiles are independent: pipeline them and shard across v7x's 2 TCs.
            dimension_semantics=("parallel",),
        ),
        cost_estimate=cost,
    )


def patch_embed_gemm(x_patches, w_mat, bias, *, tm=None, compute_dtype=None):
    """x_patches: (M, K), w_mat: (K, E), bias: (E,) -> (M, E)."""
    M, K = x_patches.shape
    E = w_mat.shape[1]
    out_dtype = x_patches.dtype

    if compute_dtype is None:
        # bf16 is MXU-native on v5e/v6e/v7x and halves X_patches HBM traffic;
        # accumulation and the bias add stay f32 inside the kernel.
        compute_dtype = jnp.bfloat16 if x_patches.dtype == jnp.float32 else x_patches.dtype

    # Lane-dense K and E: pad to multiples of 128 (unmasked vregs / full-lane stores).
    Kp = _round_up(K, 128)
    Ep = _round_up(E, 128)
    xp = x_patches.astype(compute_dtype)
    wp = w_mat.astype(compute_dtype)
    bp = bias.astype(jnp.float32)
    if Kp != K:
        xp = jnp.pad(xp, ((0, 0), (0, Kp - K)))
        wp = jnp.pad(wp, ((0, Kp - K), (0, 0)))
    if Ep != E:
        wp = jnp.pad(wp, ((0, 0), (0, Ep - E)))
        bp = jnp.pad(bp, ((0, Ep - E),))
    bp2 = bp.reshape(1, Ep)

    cb = jnp.dtype(compute_dtype).itemsize
    ob = jnp.dtype(out_dtype).itemsize
    if tm is None:
        tm = _pick_tm(M, Kp, Ep, cb, ob)
    else:
        tm = max(8, _round_up(int(tm), 8))

    out = None
    for single_buffer in (True, False):
        try:
            call = _gemm_call(M, Kp, Ep, tm, out_dtype, cb, ob,
                              single_buffer_weights=single_buffer)
            out = call(xp, wp, bp2)
            break
        except Exception:
            # Fall back to the default double-buffered pipeline if this JAX build
            # rejects pl.Buffered(1) for grid-invariant operands.
            if not single_buffer:
                raise
    return out[:, :E] if Ep != E else out


def patch_embed_naive_forward(x, conv_weight, conv_bias, patch_size,
                              *, tm=None, compute_dtype=None):
    """Reproduces PatchEmbedNaive.forward.

    x:           (B, C, H, W)   NCHW, like PyTorch
    conv_weight: (E, C, P, P)   PyTorch Conv2d weight layout
    conv_bias:   (E,)
    returns:     (B, E, H // P, W // P)
    """
    B, C, H, W = x.shape
    P = patch_size
    assert H % P == 0 and W % P == 0, "image size must match patch grid"
    E = conv_weight.shape[0]
    Hp, Wp = H // P, W // P

    # glue: extract non-overlapping patches -> (M, K) flattened as (c, kh, kw)
    xp = x.reshape(B, C, Hp, P, Wp, P)
    xp = jnp.transpose(xp, (0, 2, 4, 1, 3, 5))           # (B, Hp, Wp, C, P, P)
    x_patches = xp.reshape(B * Hp * Wp, C * P * P)       # (M, K)

    # glue: weight (E, C, P, P) -> (K, E)
    w_mat = conv_weight.reshape(E, C * P * P).T

    out_flat = patch_embed_gemm(x_patches, w_mat, conv_bias,
                                tm=tm, compute_dtype=compute_dtype)  # (M, E)

    out = out_flat.reshape(B, Hp, Wp, E)
    return jnp.transpose(out, (0, 3, 1, 2))              # (B, E, Hp, Wp)


if __name__ == "__main__":
    key = jax.random.PRNGKey(0)

    def reference(x, w, b, P):
        return jax.lax.conv_general_dilated(
            x, w, window_strides=(P, P), padding="VALID",
            dimension_numbers=("NCHW", "OIHW", "NCHW"),
            precision=jax.lax.Precision.HIGHEST,
        ) + b.reshape(1, -1, 1, 1)

    # ---- Test 1: module-consistent small shapes (img 16, patch 8, C=4, E=32) ----
    B, C, H, W, P, E = 2, 4, 16, 16, 8, 32
    k1, k2, k3, key = jax.random.split(key, 4)
    x = jax.random.normal(k1, (B, C, H, W), dtype=jnp.float32)
    w = jax.random.normal(k2, (E, C, P, P), dtype=jnp.float32) * 0.02
    b = jax.random.normal(k3, (E,), dtype=jnp.float32) * 0.02

    ref = jax.block_until_ready(reference(x, w, b, P))

    out_f32 = jax.block_until_ready(
        patch_embed_naive_forward(x, w, b, P, compute_dtype=jnp.float32))
    assert out_f32.shape == (B, E, H // P, W // P), out_f32.shape
    err = float(jnp.max(jnp.abs(out_f32 - ref)))
    assert jnp.allclose(out_f32, ref, atol=5e-3, rtol=5e-3), err

    out_bf16 = jax.block_until_ready(patch_embed_naive_forward(x, w, b, P))  # bf16 compute path
    err = float(jnp.max(jnp.abs(out_bf16 - ref)))
    assert jnp.allclose(out_bf16, ref, atol=2e-2, rtol=2e-2), err

    # ---- Test 2: multi-step grid with a partial last block + K/E padding ----
    # M = 2*5*5 = 50 rows, tm=16 -> grid of 4 (last block masked); K=192->256, E=96->128.
    B, C, H, W, P, E = 2, 3, 40, 40, 8, 96
    k1, k2, k3, key = jax.random.split(key, 4)
    x = jax.random.normal(k1, (B, C, H, W), dtype=jnp.float32)
    w = jax.random.normal(k2, (E, C, P, P), dtype=jnp.float32) * 0.02
    b = jax.random.normal(k3, (E,), dtype=jnp.float32) * 0.02

    ref = jax.block_until_ready(reference(x, w, b, P))
    out = jax.block_until_ready(
        patch_embed_naive_forward(x, w, b, P, compute_dtype=jnp.float32, tm=16))
    assert out.shape == (B, E, H // P, W // P), out.shape
    err = float(jnp.max(jnp.abs(out - ref)))
    assert jnp.allclose(out, ref, atol=5e-3, rtol=5e-3), err

    print("KERNEL_OK")
</pallas_src>

<mosaic_0001>
module attributes {stable_mosaic.version = 11 : i64} {
  func.func @_patch_embed_kernel(%arg0: i32, %arg1: memref<8x256xf32, #tpu.memory_space<vmem>>, %arg2: memref<256x128xf32, #tpu.memory_space<vmem>>, %arg3: memref<1x128xf32, #tpu.memory_space<vmem>>, %arg4: memref<8x128xf32, #tpu.memory_space<vmem>>) attributes {dimension_semantics = [#tpu.dimension_semantics<parallel>], iteration_bounds = array<i64: 1>, scalar_prefetch = 0 : i64, scratch_operands = 0 : i64, tpu.core_type = #tpu.core_type<tc>, window_params = [{transform_indices = @transform_0, window_bounds = array<i64: 8, 256>}, {pipeline_mode = #tpu.pipeline_mode<synchronous>, transform_indices = @transform_1, window_bounds = array<i64: 256, 128>}, {pipeline_mode = #tpu.pipeline_mode<synchronous>, transform_indices = @transform_2, window_bounds = array<i64: 1, 128>}, {transform_indices = @transform_3, window_bounds = array<i64: 8, 128>}]} {
    %c0 = arith.constant 0 : index
    %c0_0 = arith.constant 0 : index
    %0 = vector.load %arg1[%c0, %c0_0] : memref<8x256xf32, #tpu.memory_space<vmem>>, vector<8x256xf32>
    %c0_1 = arith.constant 0 : index
    %c0_2 = arith.constant 0 : index
    %1 = vector.load %arg2[%c0_1, %c0_2] : memref<256x128xf32, #tpu.memory_space<vmem>>, vector<256x128xf32>
    %cst = arith.constant dense<0.000000e+00> : vector<8x128xf32>
    %2 = tpu.matmul %0, %1, %cst {dimension_numbers = #tpu.dot_dimension_numbers<[1], [0], [0], [1], [0, 0, 1, 1], [], []>} : vector<8x256xf32>, vector<256x128xf32>, vector<8x128xf32> -> vector<8x128xf32>
    %c0_3 = arith.constant 0 : index
    %c0_4 = arith.constant 0 : index
    %3 = vector.load %arg3[%c0_3, %c0_4] : memref<1x128xf32, #tpu.memory_space<vmem>>, vector<1x128xf32>
    %4 = vector.broadcast %3 : vector<1x128xf32> to vector<8x128xf32>
    %5 = arith.addf %2, %4 : vector<8x128xf32>
    %c0_5 = arith.constant 0 : index
    %c0_6 = arith.constant 0 : index
    %6 = vector.load %arg4[%c0_5, %c0_6] : memref<8x128xf32, #tpu.memory_space<vmem>>, vector<8x128xf32>
    tpu.vector_store %arg4[%c0_5, %c0_6], %5 {strides = array<i32>} : memref<8x128xf32, #tpu.memory_space<vmem>>, vector<8x128xf32>,
    return
  }
  func.func @transform_0(%arg0: i32) -> (i32, i32) {
    %c0_i32 = arith.constant 0 : i32
    %c0_i32_0 = arith.constant 0 : i32
    return %arg0, %c0_i32 : i32, i32
  }
  func.func @transform_1(%arg0: i32) -> (i32, i32) {
    %c0_i32 = arith.constant 0 : i32
    %c0_i32_0 = arith.constant 0 : i32
    %c0_i32_1 = arith.constant 0 : i32
    return %c0_i32, %c0_i32_0 : i32, i32
  }
  func.func @transform_2(%arg0: i32) -> (i32, i32) {
    %c0_i32 = arith.constant 0 : i32
    %c0_i32_0 = arith.constant 0 : i32
    %c0_i32_1 = arith.constant 0 : i32
    return %c0_i32, %c0_i32_0 : i32, i32
  }
  func.func @transform_3(%arg0: i32) -> (i32, i32) {
    %c0_i32 = arith.constant 0 : i32
    %c0_i32_0 = arith.constant 0 : i32
    return %arg0, %c0_i32 : i32, i32
  }
}

module attributes {stable_mosaic.version = 11 : i64} {
  func.func @_patch_embed_kernel(%arg0: i32, %arg1: memref<8x256xf32, #tpu.memory_space<vmem>>, %arg2: memref<256x128xf32, #tpu.memory_space<vmem>>, %arg3: memref<1x128xf32, #tpu.memory_space<vmem>>, %arg4: memref<8x128xf32, #tpu.memory_space<vmem>>) attributes {dimension_semantics = [#tpu.dimension_semantics<parallel>], iteration_bounds = array<i64: 1>, scalar_prefetch = 0 : i64, scratch_operands = 0 : i64, tpu.core_type = #tpu.core_type<tc>, window_params = [{transform_indices = @transform_0, window_bounds = array<i64: 8, 256>}, {pipeline_mode = #tpu.pipeline_mode<synchronous>, transform_indices = @transform_1, window_bounds = array<i64: 256, 128>}, {pipeline_mode = #tpu.pipeline_mode<synchronous>, transform_indices = @transform_2, window_bounds = array<i64: 1, 128>}, {transform_indices = @transform_3, window_bounds = array<i64: 8, 128>}]} {
    %c0 = arith.constant 0 : index
    %c0_0 = arith.constant 0 : index
    %0 = vector.load %arg1[%c0, %c0_0] : memref<8x256xf32, #tpu.memory_space<vmem>>, vector<8x256xf32>
    %c0_1 = arith.constant 0 : index
    %c0_2 = arith.constant 0 : index
    %1 = vector.load %arg2[%c0_1, %c0_2] : memref<256x128xf32, #tpu.memory_space<vmem>>, vector<256x128xf32>
    %cst = arith.constant dense<0.000000e+00> : vector<8x128xf32>
    %2 = tpu.matmul %0, %1, %cst {dimension_numbers = #tpu.dot_dimension_numbers<[1], [0], [0], [1], [0, 0, 1, 1], [], []>} : vector<8x256xf32>, vector<256x128xf32>, vector<8x128xf32> -> vector<8x128xf32>
    %c0_3 = arith.constant 0 : index
    %c0_4 = arith.constant 0 : index
    %3 = vector.load %arg3[%c0_3, %c0_4] : memref<1x128xf32, #tpu.memory_space<vmem>>, vector<1x128xf32>
    %4 = vector.broadcast %3 : vector<1x128xf32> to vector<8x128xf32>
    %5 = arith.addf %2, %4 : vector<8x128xf32>
    %c0_5 = arith.constant 0 : index
    %c0_6 = arith.constant 0 : index
    %6 = vector.load %arg4[%c0_5, %c0_6] : memref<8x128xf32, #tpu.memory_space<vmem>>, vector<8x128xf32>
    tpu.vector_store %arg4[%c0_5, %c0_6], %5 {strides = array<i32>} : memref<8x128xf32, #tpu.memory_space<vmem>>, vector<8x128xf32>,
    return
  }
  func.func @transform_0(%arg0: i32) -> (i32, i32) {
    %c0_i32 = arith.constant 0 : i32
    %c0_i32_0 = arith.constant 0 : i32
    return %arg0, %c0_i32 : i32, i32
  }
  func.func @transform_1(%arg0: i32) -> (i32, i32) {
    %c0_i32 = arith.constant 0 : i32
    %c0_i32_0 = arith.constant 0 : i32
    %c0_i32_1 = arith.constant 0 : i32
    return %c0_i32, %c0_i32_0 : i32, i32
  }
  func.func @transform_2(%arg0: i32) -> (i32, i32) {
    %c0_i32 = arith.constant 0 : i32
    %c0_i32_0 = arith.constant 0 : i32
    %c0_i32_1 = arith.constant 0 : i32
    return %c0_i32, %c0_i32_0 : i32, i32
  }
  func.func @transform_3(%arg0: i32) -> (i32, i32) {
    %c0_i32 = arith.constant 0 : i32
    %c0_i32_0 = arith.constant 0 : i32
    return %arg0, %c0_i32 : i32, i32
  }
}

</mosaic_0001>

<llo_original>
// kernel: tpu_custom_call.1
$region0: #{tpu_custom_call.1}
  #allocation0 [shape = 'u32[]', space=smem, size = 0x4, offset = 0x4, fixed_abs, tag = 'smem constant byte address 0x4 - core index']
  #allocation1 [shape = 'u32[72,128]{1,0:T(1,128)}', space=vmem, size = 0x9000, scoped, tag = 'internal scratch']
  %s0 = inlined_call_operand.hbm [shape: f32[8,256], index: 0, kind: input, shape index: {}]
  %s1 = inlined_call_operand.hbm [shape: f32[256,128], index: 1, kind: input, shape index: {}]
  %s2 = inlined_call_operand.vmem [shape: f32[1,128], index: 2, kind: input, shape index: {}]
  %s3 = inlined_call_operand.hbm [shape: f32[8,128], index: 3, kind: output, shape index: {}]
  %s4 = sld [smem:[#allocation0]]
  $region30: #{tpu_custom_call.1} parent=0
    _
  %s6 = ssub.s32 1, %s4
  %s7 = scalar_select 0, %s6, %s4
  $region1: #{tpu_custom_call.1} parent=0
    #allocation2 [shape = 'u8[8192]{0}', space=vmem, size = 0x2000, scoped, tag = 'input window, operand 0, single buffered']
    #allocation3 [shape = 's32[1]{0}', space=sflag, size = 0x4, scoped, tag = 'scoped memory for tpu_custom_call.1']
    #allocation4 [shape = 's32[1]{0}', space=sflag, size = 0x4, scoped, tag = 'scoped memory for tpu_custom_call.1']
    #allocation5 [shape = 'u8[131072]{0}', space=vmem, size = 0x20000, scoped, tag = 'input window, operand 1, single buffered']
    #allocation6 [shape = 's32[1]{0}', space=sflag, size = 0x4, scoped, tag = 'scoped memory for tpu_custom_call.1']
    #allocation7 [shape = 'u8[4096]{0}', space=vmem, size = 0x1000, scoped, tag = 'output window, operand 0, single buffered']
    %8 = vsyncpa [#allocation3], 0
    %9 = vsyncpa [#allocation6], 0
    %10 = vsyncpa [#allocation4], 0
    // Predicated region
    $region2: #{tpu_custom_call.1} parent=1 // pred_check
      _
    $region3: #{tpu_custom_call.1} parent=1 // pred_check_branch
      %12 = sbr.rel (0) target = $region5
    $region4: #{tpu_custom_call.1} parent=1 // pred_region
      %14 = vsyncadd [#allocation3], 0
      %s16 = sshll.u32 %s0, 4
      %s17 = int_to_ptr.hbm [resolvable:$true] %s16
      %s18 = sshll.u32 [#allocation2], 4
      %s19 = int_to_ptr.vmem [resolvable:$true] %s18
      %21 = dma.hbm_to_vmem [thread:$0]  %s17, 256, %s19, [#allocation3]
    $region5: #{tpu_custom_call.1} parent=1 // pred_fallthru
      _
    // Predicated region
    $region6: #{tpu_custom_call.1} parent=1 // pred_check
      _
    $region7: #{tpu_custom_call.1} parent=1 // pred_check_branch
      %23 = sbr.rel (0) target = $region9
    $region8: #{tpu_custom_call.1} parent=1 // pred_region
      %25 = vsyncadd [#allocation6], 0
      %s26 = sshll.u32 %s1, 4
      %s27 = int_to_ptr.hbm [resolvable:$true] %s26
      %s28 = sshll.u32 [#allocation5], 4
      %s29 = int_to_ptr.vmem [resolvable:$true] %s28
      %34 = dma.hbm_to_vmem [thread:$0]  %s27, 4096, %s29, [#allocation6], 128, 128, 8
    $region9: #{tpu_custom_call.1} parent=1 // pred_fallthru
      _
    // Predicated region
    $region10: #{tpu_custom_call.1} parent=1 // pred_check
      _
    $region11: #{tpu_custom_call.1} parent=1 // pred_check_branch
      %36 = sbr.rel (0) target = $region13
    $region12: #{tpu_custom_call.1} parent=1 // pred_region
      _
    $region13: #{tpu_custom_call.1} parent=1 // pred_fallthru
      _
    // Predicated region
    $region14: #{tpu_custom_call.1} parent=1 // pred_check
      _
    $region15: #{tpu_custom_call.1} parent=1 // pred_check_branch
      %38 = sbr.rel (0) target = $region17
    $region16: #{tpu_custom_call.1} parent=1 // pred_region
      %40 = dma.done [#allocation3], 256
    $region17: #{tpu_custom_call.1} parent=1 // pred_fallthru
      _
    // Predicated region
    $region18: #{tpu_custom_call.1} parent=1 // pred_check
      _
    $region19: #{tpu_custom_call.1} parent=1 // pred_check_branch
      %42 = sbr.rel (0) target = $region21
    $region20: #{tpu_custom_call.1} parent=1 // pred_region
      %44 = dma.done [#allocation6], 4096
    $region21: #{tpu_custom_call.1} parent=1 // pred_fallthru
      _
    %v45 = vld [vmem:[#allocation2] sm:$0xff]
    %v46 = vld [vmem:[#allocation2 + $0x8] sm:$0xff]
    %v47 = vld [vmem:[#allocation5] sm:$0xff]
    %v48 = vld [vmem:[#allocation5 + $0x8] sm:$0xff]
    %v49 = vld [vmem:[#allocation5 + $0x10] sm:$0xff]
    %v50 = vld [vmem:[#allocation5 + $0x18] sm:$0xff]
    %v51 = vld [vmem:[#allocation5 + $0x20] sm:$0xff]
    %v52 = vld [vmem:[#allocation5 + $0x28] sm:$0xff]
    %v53 = vld [vmem:[#allocation5 + $0x30] sm:$0xff]
    %v54 = vld [vmem:[#allocation5 + $0x38] sm:$0xff]
    %v55 = vld [vmem:[#allocation5 + $0x40] sm:$0xff]
    %v56 = vld [vmem:[#allocation5 + $0x48] sm:$0xff]
    %v57 = vld [vmem:[#allocation5 + $0x50] sm:$0xff]
    %v58 = vld [vmem:[#allocation5 + $0x58] sm:$0xff]
    %v59 = vld [vmem:[#allocation5 + $0x60] sm:$0xff]
    %v60 = vld [vmem:[#allocation5 + $0x68] sm:$0xff]
    %v61 = vld [vmem:[#allocation5 + $0x70] sm:$0xff]
    %v62 = vld [vmem:[#allocation5 + $0x78] sm:$0xff]
    %v63 = vld [vmem:[#allocation5 + $0x80] sm:$0xff]
    %v64 = vld [vmem:[#allocation5 + $0x88] sm:$0xff]
    %v65 = vld [vmem:[#allocation5 + $0x90] sm:$0xff]
    %v66 = vld [vmem:[#allocation5 + $0x98] sm:$0xff]
    %v67 = vld [vmem:[#allocation5 + $0xa0] sm:$0xff]
    %v68 = vld [vmem:[#allocation5 + $0xa8] sm:$0xff]
    %v69 = vld [vmem:[#allocation5 + $0xb0] sm:$0xff]
    %v70 = vld [vmem:[#allocation5 + $0xb8] sm:$0xff]
    %v71 = vld [vmem:[#allocation5 + $0xc0] sm:$0xff]
    %v72 = vld [vmem:[#allocation5 + $0xc8] sm:$0xff]
    %v73 = vld [vmem:[#allocation5 + $0xd0] sm:$0xff]
    %v74 = vld [vmem:[#allocation5 + $0xd8] sm:$0xff]
    %v75 = vld [vmem:[#allocation5 + $0xe0] sm:$0xff]
    %v76 = vld [vmem:[#allocation5 + $0xe8] sm:$0xff]
    %v77 = vld [vmem:[#allocation5 + $0xf0] sm:$0xff]
    %v78 = vld [vmem:[#allocation5 + $0xf8] sm:$0xff]
    %v79 = vld [vmem:[%s2] sm:$0x1]
    %v81 = vperm.slane %v79, 0
    %83 = vmatpush.msra.mxu0 %v62
    %84 = vmatpush.msra.mxu0 %v61
    %85 = vmatpush.msra.mxu0 %v60
    %86 = vmatpush.msra.mxu0 %v59
    %87 = vmatpush.msra.mxu0 %v58
    %88 = vmatpush.msra.mxu0 %v57
    %89 = vmatpush.msra.mxu0 %v56
    %90 = vmatpush.msra.mxu0 %v55
    %91 = vmatpush.msra.mxu0 %v54
    %92 = vmatpush.msra.mxu0 %v53
    %93 = vmatpush.msra.mxu0 %v52
    %94 = vmatpush.msra.mxu0 %v51
    %95 = vmatpush.msra.mxu0 %v50
    %96 = vmatpush.msra.mxu0 %v49
    %97 = vmatpush.msra.mxu0 %v48
    %98 = vmatpush.msra.mxu0 %v47
    %99 = vmatmul.f32.gmra.mxu0 %v45
    %v100 = vpop.f32.mrf.mxu0
    %v101 = vadd.f32 %v81, %v100
    %102 = vdwg.mxu0
    %103 = vmatpush.msra.mxu0 %v78
    %104 = vmatpush.msra.mxu0 %v77
    %105 = vmatpush.msra.mxu0 %v76
    %106 = vmatpush.msra.mxu0 %v75
    %107 = vmatpush.msra.mxu0 %v74
    %108 = vmatpush.msra.mxu0 %v73
    %109 = vmatpush.msra.mxu0 %v72
    %110 = vmatpush.msra.mxu0 %v71
    %111 = vmatpush.msra.mxu0 %v70
    %112 = vmatpush.msra.mxu0 %v69
    %113 = vmatpush.msra.mxu0 %v68
    %114 = vmatpush.msra.mxu0 %v67
    %115 = vmatpush.msra.mxu0 %v66
    %116 = vmatpush.msra.mxu0 %v65
    %117 = vmatpush.msra.mxu0 %v64
    %118 = vmatpush.msra.mxu0 %v63
    %119 = vmatmul.f32.gmra.mxu0 %v46
    %v120 = vpop.f32.mrf.mxu0
    %v121 = vadd.f32 %v101, %v120
    %122 = vdwg.mxu0
    %123 = vst [vmem:[#allocation7] sm:$0xff] %v121
    // Predicated region
    $region22: #{tpu_custom_call.1} parent=1 // pred_check
      _
    $region23: #{tpu_custom_call.1} parent=1 // pred_check_branch
      %125 = sbr.rel (0) target = $region25
    $region24: #{tpu_custom_call.1} parent=1 // pred_region
      %127 = vsyncadd [#allocation4], 0
      %s129 = sshll.u32 [#allocation7], 4
      %s130 = int_to_ptr.vmem [resolvable:$true] %s129
      %s131 = sshll.u32 %s3, 4
      %s132 = int_to_ptr.hbm [resolvable:$true] %s131
      %134 = dma.vmem_to_hbm [thread:$0]  %s130, 128, %s132, [#allocation4]
    $region25: #{tpu_custom_call.1} parent=1 // pred_fallthru
      _
    // Predicated region
    $region26: #{tpu_custom_call.1} parent=1 // pred_check
      _
    $region27: #{tpu_custom_call.1} parent=1 // pred_check_branch
      %136 = sbr.rel (0) target = $region29
    $region28: #{tpu_custom_call.1} parent=1 // pred_region
      %138 = dma.done [#allocation4], 128
    $region29: #{tpu_custom_call.1} parent=1 // pred_fallthru
      _
    %139 = vsyncpa [#allocation3], 1
    %140 = vsyncpa [#allocation6], 1
    %141 = vsyncpa [#allocation4], 1

// kernel: tpu_custom_call.1
$region0: #{tpu_custom_call.1}
  #allocation0 [shape = 'u32[]', space=smem, size = 0x4, offset = 0x4, fixed_abs, tag = 'smem constant byte address 0x4 - core index']
  #allocation1 [shape = 'u32[72,128]{1,0:T(1,128)}', space=vmem, size = 0x9000, scoped, tag = 'internal scratch']
  %s0 = inlined_call_operand.hbm [shape: f32[8,256], index: 0, kind: input, shape index: {}]
  %s1 = inlined_call_operand.hbm [shape: f32[256,128], index: 1, kind: input, shape index: {}]
  %s2 = inlined_call_operand.vmem [shape: f32[1,128], index: 2, kind: input, shape index: {}]
  %s3 = inlined_call_operand.hbm [shape: f32[8,128], index: 3, kind: output, shape index: {}]
  %s4 = sld [smem:[#allocation0]]
  $region30: #{tpu_custom_call.1} parent=0
    _
  %s6 = ssub.s32 1, %s4
  %s7 = scalar_select 0, %s6, %s4
  $region1: #{tpu_custom_call.1} parent=0
    #allocation2 [shape = 'u8[8192]{0}', space=vmem, size = 0x2000, scoped, tag = 'input window, operand 0, single buffered']
    #allocation3 [shape = 's32[1]{0}', space=sflag, size = 0x4, scoped, tag = 'scoped memory for tpu_custom_call.1']
    #allocation4 [shape = 's32[1]{0}', space=sflag, size = 0x4, scoped, tag = 'scoped memory for tpu_custom_call.1']
    #allocation5 [shape = 'u8[131072]{0}', space=vmem, size = 0x20000, scoped, tag = 'input window, operand 1, single buffered']
    #allocation6 [shape = 's32[1]{0}', space=sflag, size = 0x4, scoped, tag = 'scoped memory for tpu_custom_call.1']
    #allocation7 [shape = 'u8[4096]{0}', space=vmem, size = 0x1000, scoped, tag = 'output window, operand 0, single buffered']
    %8 = vsyncpa [#allocation3], 0
    %9 = vsyncpa [#allocation6], 0
    %10 = vsyncpa [#allocation4], 0
    // Predicated region
    $region2: #{tpu_custom_call.1} parent=1 // pred_check
      _
    $region3: #{tpu_custom_call.1} parent=1 // pred_check_branch
      %12 = sbr.rel (0) target = $region5
    $region4: #{tpu_custom_call.1} parent=1 // pred_region
      %14 = vsyncadd [#allocation3], 0
      %s16 = sshll.u32 %s0, 4
      %s17 = int_to_ptr.hbm [resolvable:$true] %s16
      %s18 = sshll.u32 [#allocation2], 4
      %s19 = int_to_ptr.vmem [resolvable:$true] %s18
      %21 = dma.hbm_to_vmem [thread:$0]  %s17, 256, %s19, [#allocation3]
    $region5: #{tpu_custom_call.1} parent=1 // pred_fallthru
      _
    // Predicated region
    $region6: #{tpu_custom_call.1} parent=1 // pred_check
      _
    $region7: #{tpu_custom_call.1} parent=1 // pred_check_branch
      %23 = sbr.rel (0) target = $region9
    $region8: #{tpu_custom_call.1} parent=1 // pred_region
      %25 = vsyncadd [#allocation6], 0
      %s26 = sshll.u32 %s1, 4
      %s27 = int_to_ptr.hbm [resolvable:$true] %s26
      %s28 = sshll.u32 [#allocation5], 4
      %s29 = int_to_ptr.vmem [resolvable:$true] %s28
      %34 = dma.hbm_to_vmem [thread:$0]  %s27, 4096, %s29, [#allocation6], 128, 128, 8
    $region9: #{tpu_custom_call.1} parent=1 // pred_fallthru
      _
    // Predicated region
    $region10: #{tpu_custom_call.1} parent=1 // pred_check
      _
    $region11: #{tpu_custom_call.1} parent=1 // pred_check_branch
      %36 = sbr.rel (0) target = $region13
    $region12: #{tpu_custom_call.1} parent=1 // pred_region
      _
    $region13: #{tpu_custom_call.1} parent=1 // pred_fallthru
      _
    // Predicated region
    $region14: #{tpu_custom_call.1} parent=1 // pred_check
      _
    $region15: #{tpu_custom_call.1} parent=1 // pred_check_branch
      %38 = sbr.rel (0) target = $region17
    $region16: #{tpu_custom_call.1} parent=1 // pred_region
      %40 = dma.done [#allocation3], 256
    $region17: #{tpu_custom_call.1} parent=1 // pred_fallthru
      _
    // Predicated region
    $region18: #{tpu_custom_call.1} parent=1 // pred_check
      _
    $region19: #{tpu_custom_call.1} parent=1 // pred_check_branch
      %42 = sbr.rel (0) target = $region21
    $region20: #{tpu_custom_call.1} parent=1 // pred_region
      %44 = dma.done [#allocation6], 4096
    $region21: #{tpu_custom_call.1} parent=1 // pred_fallthru
      _
    %v45 = vld [vmem:[#allocation2] sm:$0xff]
    %v46 = vld [vmem:[#allocation2 + $0x8] sm:$0xff]
    %v47 = vld [vmem:[#allocation5] sm:$0xff]
    %v48 = vld [vmem:[#allocation5 + $0x8] sm:$0xff]
    %v49 = vld [vmem:[#allocation5 + $0x10] sm:$0xff]
    %v50 = vld [vmem:[#allocation5 + $0x18] sm:$0xff]
    %v51 = vld [vmem:[#allocation5 + $0x20] sm:$0xff]
    %v52 = vld [vmem:[#allocation5 + $0x28] sm:$0xff]
    %v53 = vld [vmem:[#allocation5 + $0x30] sm:$0xff]
    %v54 = vld [vmem:[#allocation5 + $0x38] sm:$0xff]
    %v55 = vld [vmem:[#allocation5 + $0x40] sm:$0xff]
    %v56 = vld [vmem:[#allocation5 + $0x48] sm:$0xff]
    %v57 = vld [vmem:[#allocation5 + $0x50] sm:$0xff]
    %v58 = vld [vmem:[#allocation5 + $0x58] sm:$0xff]
    %v59 = vld [vmem:[#allocation5 + $0x60] sm:$0xff]
    %v60 = vld [vmem:[#allocation5 + $0x68] sm:$0xff]
    %v61 = vld [vmem:[#allocation5 + $0x70] sm:$0xff]
    %v62 = vld [vmem:[#allocation5 + $0x78] sm:$0xff]
    %v63 = vld [vmem:[#allocation5 + $0x80] sm:$0xff]
    %v64 = vld [vmem:[#allocation5 + $0x88] sm:$0xff]
    %v65 = vld [vmem:[#allocation5 + $0x90] sm:$0xff]
    %v66 = vld [vmem:[#allocation5 + $0x98] sm:$0xff]
    %v67 = vld [vmem:[#allocation5 + $0xa0] sm:$0xff]
    %v68 = vld [vmem:[#allocation5 + $0xa8] sm:$0xff]
    %v69 = vld [vmem:[#allocation5 + $0xb0] sm:$0xff]
    %v70 = vld [vmem:[#allocation5 + $0xb8] sm:$0xff]
    %v71 = vld [vmem:[#allocation5 + $0xc0] sm:$0xff]
    %v72 = vld [vmem:[#allocation5 + $0xc8] sm:$0xff]
    %v73 = vld [vmem:[#allocation5 + $0xd0] sm:$0xff]
    %v74 = vld [vmem:[#allocation5 + $0xd8] sm:$0xff]
    %v75 = vld [vmem:[#allocation5 + $0xe0] sm:$0xff]
    %v76 = vld [vmem:[#allocation5 + $0xe8] sm:$0xff]
    %v77 = vld [vmem:[#allocation5 + $0xf0] sm:$0xff]
    %v78 = vld [vmem:[#allocation5 + $0xf8] sm:$0xff]
    %v79 = vld [vmem:[%s2] sm:$0x1]
    %v81 = vperm.slane %v79, 0
    %83 = vmatpush.msra.mxu0 %v62
    %84 = vmatpush.msra.mxu0 %v61
    %85 = vmatpush.msra.mxu0 %v60
    %86 = vmatpush.msra.mxu0 %v59
    %87 = vmatpush.msra.mxu0 %v58
    %88 = vmatpush.msra.mxu0 %v57
    %89 = vmatpush.msra.mxu0 %v56
    %90 = vmatpush.msra.mxu0 %v55
    %91 = vmatpush.msra.mxu0 %v54
    %92 = vmatpush.msra.mxu0 %v53
    %93 = vmatpush.msra.mxu0 %v52
    %94 = vmatpush.msra.mxu0 %v51
    %95 = vmatpush.msra.mxu0 %v50
    %96 = vmatpush.msra.mxu0 %v49
    %97 = vmatpush.msra.mxu0 %v48
    %98 = vmatpush.msra.mxu0 %v47
    %99 = vmatmul.f32.gmra.mxu0 %v45
    %v100 = vpop.f32.mrf.mxu0
    %v101 = vadd.f32 %v81, %v100
    %102 = vdwg.mxu0
    %103 = vmatpush.msra.mxu0 %v78
    %104 = vmatpush.msra.mxu0 %v77
    %105 = vmatpush.msra.mxu0 %v76
    %106 = vmatpush.msra.mxu0 %v75
    %107 = vmatpush.msra.mxu0 %v74
    %108 = vmatpush.msra.mxu0 %v73
    %109 = vmatpush.msra.mxu0 %v72
    %110 = vmatpush.msra.mxu0 %v71
    %111 = vmatpush.msra.mxu0 %v70
    %112 = vmatpush.msra.mxu0 %v69
    %113 = vmatpush.msra.mxu0 %v68
    %114 = vmatpush.msra.mxu0 %v67
    %115 = vmatpush.msra.mxu0 %v66
    %116 = vmatpush.msra.mxu0 %v65
    %117 = vmatpush.msra.mxu0 %v64
    %118 = vmatpush.msra.mxu0 %v63
    %119 = vmatmul.f32.gmra.mxu0 %v46
    %v120 = vpop.f32.mrf.mxu0
    %v121 = vadd.f32 %v101, %v120
    %122 = vdwg.mxu0
    %123 = vst [vmem:[#allocation7] sm:$0xff] %v121
    // Predicated region
    $region22: #{tpu_custom_call.1} parent=1 // pred_check
      _
    $region23: #{tpu_custom_call.1} parent=1 // pred_check_branch
      %125 = sbr.rel (0) target = $region25
    $region24: #{tpu_custom_call.1} parent=1 // pred_region
      %127 = vsyncadd [#allocation4], 0
      %s129 = sshll.u32 [#allocation7], 4
      %s130 = int_to_ptr.vmem [resolvable:$true] %s129
      %s131 = sshll.u32 %s3, 4
      %s132 = int_to_ptr.hbm [resolvable:$true] %s131
      %134 = dma.vmem_to_hbm [thread:$0]  %s130, 128, %s132, [#allocation4]
    $region25: #{tpu_custom_call.1} parent=1 // pred_fallthru
      _
    // Predicated region
    $region26: #{tpu_custom_call.1} parent=1 // pred_check
      _
    $region27: #{tpu_custom_call.1} parent=1 // pred_check_branch
      %136 = sbr.rel (0) target = $region29
    $region28: #{tpu_custom_call.1} parent=1 // pred_region
      %138 = dma.done [#allocation4], 128
    $region29: #{tpu_custom_call.1} parent=1 // pred_fallthru
      _
    %139 = vsyncpa [#allocation3], 1
    %140 = vsyncpa [#allocation6], 1
    %141 = vsyncpa [#allocation4], 1

</llo_original>
